<compile_context>
chip_gen: v5e
topology: v5e:2x2
jax: 0.10.0
libtpu: 0.0.40
codegen_flags: <defaults>
</compile_context>

<pallas_src>
import functools

import jax
import jax.numpy as jnp
import numpy as np
from jax import lax
from jax.experimental import pallas as pl
from jax.experimental.pallas import tpu as pltpu


def _round_up(v: int, m: int) -> int:
    return ((v + m - 1) // m) * m


# ---------------------------------------------------------------------------
# Kernel
# ---------------------------------------------------------------------------
def _decoder_kernel(x_ref, w1_ref, b1_ref, w2_ref, b2_ref, o_ref, *, n_chunks):
    """One batch tile: y = ReLU(x @ W1 + b1) @ W2 + b2, hidden dim chunked.

    Prepared operand layouts (leading axis = hidden chunk):
      w1: (n_chunks, d_in, hc)    b1: (n_chunks, 1, hc)   [b1 is f32]
      w2: (n_chunks, hc, d_out)   b2: (1, d_out)          [b2 is f32]
    MXU operands use w1.dtype (bf16 by default); accumulation and the bias/ReLU
    epilogue stay f32.  x is cast in-kernel (avoids a wrapper-side cast round trip).
    """
    cdt = w1_ref.dtype
    x = x_ref[...].astype(cdt)

    def chunk(c, acc):
        h = jnp.dot(x, w1_ref[c], preferred_element_type=jnp.float32)
        h = jnp.maximum(h + b1_ref[c], 0.0)                       # f32 epilogue (VPU)
        return acc + jnp.dot(h.astype(cdt), w2_ref[c],
                             preferred_element_type=jnp.float32)

    acc0 = jnp.zeros(o_ref.shape, jnp.float32)
    if n_chunks == 1:
        acc = chunk(0, acc0)
    else:
        acc = lax.fori_loop(0, n_chunks, chunk, acc0, unroll=n_chunks <= 4)
    o_ref[...] = (acc + b2_ref[...]).astype(o_ref.dtype)


# ---------------------------------------------------------------------------
# One-time parameter preparation (hoisted out of the per-call hot path)
# ---------------------------------------------------------------------------
def prepare_decoder_params(w1, b1, w2, b2, *, compute_dtype=jnp.bfloat16,
                           hidden_chunk=512):
    """Pack decoder parameters once; reuse across forward calls.

    * Casts the MXU operands to `compute_dtype` (bf16 default; jnp.float32 for an
      exact path).  Biases stay f32 (f32 bias/ReLU epilogue in the kernel).
    * Pads the hidden dim to a multiple of 128 with zeros (exact: zero weight cols +
      zero bias -> ReLU(0) = 0 -> zero rows of W2 contribute nothing).
    * Splits the hidden dim into chunks of `hc` columns on a leading axis so the
      kernel can walk them with a cheap leading-axis dynamic index.
    Weights use the (in_features, out_features) layout (i.e. PyTorch weight.T).
    """
    d_in, hidden = w1.shape
    h2, d_out = w2.shape
    assert h2 == hidden and b1.size == hidden and b2.size == d_out

    hidden128 = _round_up(hidden, 128)
    chunk = _round_up(min(max(int(hidden_chunk), 128), hidden128), 128)
    n_chunks = pl.cdiv(hidden128, chunk)
    hc = _round_up(pl.cdiv(hidden128, n_chunks), 128)
    hidden_p = n_chunks * hc

    w1p = jnp.pad(w1.astype(compute_dtype), ((0, 0), (0, hidden_p - hidden)))
    w1p = w1p.reshape(d_in, n_chunks, hc).transpose(1, 0, 2)        # (n, d_in, hc)
    b1p = jnp.pad(jnp.ravel(b1).astype(jnp.float32), (0, hidden_p - hidden))
    b1p = b1p.reshape(n_chunks, 1, hc)                               # (n, 1, hc)
    w2p = jnp.pad(w2.astype(compute_dtype), ((0, hidden_p - hidden), (0, 0)))
    w2p = w2p.reshape(n_chunks, hc, d_out)                           # (n, hc, d_out)
    b2p = jnp.ravel(b2).astype(jnp.float32).reshape(1, d_out)        # (1, d_out)
    return w1p, b1p, w2p, b2p


# ---------------------------------------------------------------------------
# Forward wrapper
# ---------------------------------------------------------------------------
@functools.partial(jax.jit, static_argnames=("block_batch",))
def decoder_forward(x, w1p, b1p, w2p, b2p, *, block_batch=512):
    """Decoder forward: x (B, d_in) -> (B, d_out).  Params from prepare_decoder_params."""
    B, d_in = x.shape
    n_chunks, d_in_w, hc = w1p.shape
    d_out = w2p.shape[-1]
    assert d_in_w == d_in, "x feature dim does not match prepared w1"
    out_dtype = x.dtype

    w_itemsize = w1p.dtype.itemsize
    x_itemsize = x.dtype.itemsize
    # Native sublane tile of the streamed arrays (x / out): 8 rows for 32-bit,
    # 16 for 16-bit, 32 for 8-bit -> keeps loads/stores vreg-dense and unmasked.
    sublane = {4: 8, 2: 16, 1: 32}.get(x_itemsize, 8)

    # ---- Row tile: keep >= 2 grid tiles when possible (both v7x TCs get work). ----
    if B <= sublane:
        tm = B                                            # single full-dim block
    else:
        n_tiles = max(pl.cdiv(B, block_batch), 2)
        tm = min(_round_up(pl.cdiv(B, n_tiles), sublane), _round_up(B, sublane))

    # ---- VMEM budgeting (conservative for v7x's 64 MiB physical VMEM). ----
    weight_bytes = w1p.size * w_itemsize + w2p.size * w_itemsize
    # Resident (constant-index) operands never get re-DMA'd; dropping their second
    # pipeline buffer only matters once they occupy real VMEM.
    single_buffer_weights = weight_bytes > (4 << 20)

    def vmem_estimate(rows):
        lane = lambda v: _round_up(v, 128)
        sub = lambda v: _round_up(max(v, 1), 8)
        wbuf = 1 if single_buffer_weights else 2
        est = 2 * sub(rows) * lane(d_in) * x_itemsize             # x (double-buffered)
        est += 2 * sub(rows) * lane(d_out) * out_dtype.itemsize   # out (double-buffered)
        est += wbuf * (n_chunks * sub(d_in) * lane(hc) * w_itemsize
                       + n_chunks * sub(hc) * lane(d_out) * w_itemsize)
        est += wbuf * (n_chunks * 8 * lane(hc) + 8 * lane(d_out)) * 4   # biases (f32)
        # live in-kernel values: x cast, one h chunk, f32 accumulator
        est += sub(rows) * (lane(d_in) * w_itemsize + lane(hc) * 4 + lane(d_out) * 4)
        return est

    VMEM_BUDGET = 48 << 20
    while tm > sublane and vmem_estimate(tm) > VMEM_BUDGET:
        tm = max(sublane, _round_up(tm // 2, sublane))
    if tm >= B:
        tm = B
    grid = (pl.cdiv(B, tm),)

    vmem_limit = int(min(max(vmem_estimate(tm) * 5 // 4 + (2 << 20), 32 << 20), 64 << 20))

    hidden_p = n_chunks * hc
    cost = pl.CostEstimate(
        flops=int(2 * B * (d_in * hidden_p + hidden_p * d_out)),
        transcendentals=0,
        bytes_accessed=int(x.size * x_itemsize + weight_bytes
                           + (b1p.size + b2p.size) * 4
                           + B * d_out * out_dtype.itemsize),
    )

    wkw = dict(pipeline_mode=pl.Buffered(1)) if single_buffer_weights else {}

    return pl.pallas_call(
        functools.partial(_decoder_kernel, n_chunks=n_chunks),
        out_shape=jax.ShapeDtypeStruct((B, d_out), out_dtype),
        grid=grid,
        in_specs=[
            pl.BlockSpec((tm, d_in), lambda i: (i, 0)),            # x: batch-tiled
            pl.BlockSpec(w1p.shape, lambda i: (0, 0, 0), **wkw),    # w1: VMEM-resident
            pl.BlockSpec(b1p.shape, lambda i: (0, 0, 0), **wkw),    # b1: VMEM-resident
            pl.BlockSpec(w2p.shape, lambda i: (0, 0, 0), **wkw),    # w2: VMEM-resident
            pl.BlockSpec(b2p.shape, lambda i: (0, 0), **wkw),       # b2: VMEM-resident
        ],
        out_specs=pl.BlockSpec((tm, d_out), lambda i: (i, 0)),
        compiler_params=pltpu.CompilerParams(
            dimension_semantics=("parallel",),   # v7x: shard batch tiles over its 2 TCs
            vmem_limit_bytes=vmem_limit,
        ),
        cost_estimate=cost,
    )(x, w1p, b1p, w2p, b2p)


# ---------------------------------------------------------------------------
# Reference / init helpers
# ---------------------------------------------------------------------------
def xavier_uniform(key, shape, gain=0.5, dtype=jnp.float32):
    # Matches PyTorch nn.init.xavier_uniform_(weight, gain=0.5) for a Linear whose
    # weight is (out, in); we generate the transposed (in, out) layout directly.
    fan_in, fan_out = shape
    bound = gain * float(np.sqrt(6.0 / (fan_in + fan_out)))
    return jax.random.uniform(key, shape, dtype=dtype, minval=-bound, maxval=bound)


def reference_forward(x, w1, b1, w2, b2):
    h = jnp.maximum(jnp.dot(x, w1, precision="highest") + b1.reshape(1, -1), 0.0)
    return jnp.dot(h, w2, precision="highest") + b2.reshape(1, -1)


if __name__ == "__main__":
    key = jax.random.PRNGKey(0)
    kx, kw1, kw2, kx2, kw3, kb3, kw4, kb4 = jax.random.split(key, 8)

    # ---- Case 1: module-style init (zero bias, xavier gain=0.5), default bf16 MXU path.
    batch, input_dim, hidden_dim, output_dim = 4, 8, 32, 16
    x = jax.random.normal(kx, (batch, input_dim), dtype=jnp.float32)
    w1 = xavier_uniform(kw1, (input_dim, hidden_dim))
    b1 = jnp.zeros((hidden_dim,), jnp.float32)
    w2 = xavier_uniform(kw2, (hidden_dim, output_dim))
    b2 = jnp.zeros((output_dim,), jnp.float32)

    params = prepare_decoder_params(w1, b1, w2, b2)          # bf16 MXU operands
    out = jax.block_until_ready(decoder_forward(x, *params))
    ref = reference_forward(x, w1, b1, w2, b2)
    np.testing.assert_allclose(np.asarray(out), np.asarray(ref), rtol=3e-2, atol=3e-2)

    # ---- Case 2: exact f32 path, multi-chunk hidden dim, multi-tile ragged batch,
    # ---- nonzero biases (exercises the fori_loop accumulation and edge masking).
    B2, D2, H2, O2 = 20, 8, 320, 16
    x2 = jax.random.normal(kx2, (B2, D2), dtype=jnp.float32)
    w1b = xavier_uniform(kw3, (D2, H2))
    b1b = 0.1 * jax.random.normal(kb3, (H2,), dtype=jnp.float32)
    w2b = xavier_uniform(kw4, (H2, O2))
    b2b = 0.1 * jax.random.normal(kb4, (O2,), dtype=jnp.float32)

    params2 = prepare_decoder_params(w1b, b1b, w2b, b2b,
                                     compute_dtype=jnp.float32, hidden_chunk=128)
    out2 = jax.block_until_ready(decoder_forward(x2, *params2))
    ref2 = reference_forward(x2, w1b, b1b, w2b, b2b)
    np.testing.assert_allclose(np.asarray(out2), np.asarray(ref2), rtol=1e-5, atol=1e-5)

    print("KERNEL_OK")
</pallas_src>

<mosaic_0001>
module attributes {stable_mosaic.version = 11 : i64} {
  func.func @_decoder_kernel(%arg0: i32, %arg1: memref<4x8xf32, #tpu.memory_space<vmem>>, %arg2: memref<1x8x128xbf16, #tpu.memory_space<vmem>>, %arg3: memref<1x1x128xf32, #tpu.memory_space<vmem>>, %arg4: memref<1x128x16xbf16, #tpu.memory_space<vmem>>, %arg5: memref<1x16xf32, #tpu.memory_space<vmem>>, %arg6: memref<4x16xf32, #tpu.memory_space<vmem>>) attributes {dimension_semantics = [#tpu.dimension_semantics<parallel>], iteration_bounds = array<i64: 1>, scalar_prefetch = 0 : i64, scratch_operands = 0 : i64, tpu.core_type = #tpu.core_type<tc>, window_params = [{transform_indices = @transform_0, window_bounds = array<i64: 4, 8>}, {pipeline_mode = #tpu.pipeline_mode<synchronous>, transform_indices = @transform_1, window_bounds = array<i64: 1, 8, 128>}, {pipeline_mode = #tpu.pipeline_mode<synchronous>, transform_indices = @transform_2, window_bounds = array<i64: 1, 1, 128>}, {pipeline_mode = #tpu.pipeline_mode<synchronous>, transform_indices = @transform_3, window_bounds = array<i64: 1, 128, 16>}, {pipeline_mode = #tpu.pipeline_mode<synchronous>, transform_indices = @transform_4, window_bounds = array<i64: 1, 16>}, {transform_indices = @transform_5, window_bounds = array<i64: 4, 16>}]} {
    %c0 = arith.constant 0 : index
    %c0_0 = arith.constant 0 : index
    %0 = vector.load %arg1[%c0, %c0_0] : memref<4x8xf32, #tpu.memory_space<vmem>>, vector<4x8xf32>
    %1 = arith.truncf %0 : vector<4x8xf32> to vector<4x8xbf16>
    %cst = arith.constant 0.000000e+00 : f32
    %2 = vector.broadcast %cst : f32 to vector<4x16xf32>
    %c0_1 = arith.constant 0 : index
    %c0_2 = arith.constant 0 : index
    %c0_3 = arith.constant 0 : index
    %3 = vector.load %arg2[%c0_1, %c0_2, %c0_3] : memref<1x8x128xbf16, #tpu.memory_space<vmem>>, vector<1x8x128xbf16>
    %4 = vector.shape_cast %3 : vector<1x8x128xbf16> to vector<8x128xbf16>
    %cst_4 = arith.constant dense<0.000000e+00> : vector<4x128xf32>
    %5 = tpu.matmul %1, %4, %cst_4 {dimension_numbers = #tpu.dot_dimension_numbers<[1], [0], [0], [1], [0, 0, 1, 1], [], []>} : vector<4x8xbf16>, vector<8x128xbf16>, vector<4x128xf32> -> vector<4x128xf32>
    %c0_5 = arith.constant 0 : index
    %c0_6 = arith.constant 0 : index
    %c0_7 = arith.constant 0 : index
    %6 = vector.load %arg3[%c0_5, %c0_6, %c0_7] : memref<1x1x128xf32, #tpu.memory_space<vmem>>, vector<1x1x128xf32>
    %7 = vector.shape_cast %6 : vector<1x1x128xf32> to vector<1x128xf32>
    %8 = vector.broadcast %7 : vector<1x128xf32> to vector<4x128xf32>
    %9 = arith.addf %5, %8 : vector<4x128xf32>
    %cst_8 = arith.constant 0.000000e+00 : f32
    %10 = vector.broadcast %cst_8 : f32 to vector<4x128xf32>
    %11 = arith.maximumf %9, %10 : vector<4x128xf32>
    %12 = arith.truncf %11 : vector<4x128xf32> to vector<4x128xbf16>
    %c0_9 = arith.constant 0 : index
    %c0_10 = arith.constant 0 : index
    %c0_11 = arith.constant 0 : index
    %13 = vector.load %arg4[%c0_9, %c0_10, %c0_11] : memref<1x128x16xbf16, #tpu.memory_space<vmem>>, vector<1x128x16xbf16>
    %14 = vector.shape_cast %13 : vector<1x128x16xbf16> to vector<128x16xbf16>
    %cst_12 = arith.constant dense<0.000000e+00> : vector<4x16xf32>
    %15 = tpu.matmul %12, %14, %cst_12 {dimension_numbers = #tpu.dot_dimension_numbers<[1], [0], [0], [1], [0, 0, 1, 1], [], []>} : vector<4x128xbf16>, vector<128x16xbf16>, vector<4x16xf32> -> vector<4x16xf32>
    %16 = arith.addf %2, %15 : vector<4x16xf32>
    %c0_13 = arith.constant 0 : index
    %c0_14 = arith.constant 0 : index
    %17 = vector.load %arg5[%c0_13, %c0_14] : memref<1x16xf32, #tpu.memory_space<vmem>>, vector<1x16xf32>
    %18 = vector.broadcast %17 : vector<1x16xf32> to vector<4x16xf32>
    %19 = arith.addf %16, %18 : vector<4x16xf32>
    %c0_15 = arith.constant 0 : index
    %c0_16 = arith.constant 0 : index
    %20 = vector.load %arg6[%c0_15, %c0_16] : memref<4x16xf32, #tpu.memory_space<vmem>>, vector<4x16xf32>
    tpu.vector_store %arg6[%c0_15, %c0_16], %19 {strides = array<i32>} : memref<4x16xf32, #tpu.memory_space<vmem>>, vector<4x16xf32>,
    return
  }
  func.func @transform_0(%arg0: i32) -> (i32, i32) {
    %c0_i32 = arith.constant 0 : i32
    %c0_i32_0 = arith.constant 0 : i32
    return %arg0, %c0_i32 : i32, i32
  }
  func.func @transform_1(%arg0: i32) -> (i32, i32, i32) {
    %c0_i32 = arith.constant 0 : i32
    %c0_i32_0 = arith.constant 0 : i32
    %c0_i32_1 = arith.constant 0 : i32
    %c0_i32_2 = arith.constant 0 : i32
    return %c0_i32, %c0_i32_0, %c0_i32_1 : i32, i32, i32
  }
  func.func @transform_2(%arg0: i32) -> (i32, i32, i32) {
    %c0_i32 = arith.constant 0 : i32
    %c0_i32_0 = arith.constant 0 : i32
    %c0_i32_1 = arith.constant 0 : i32
    %c0_i32_2 = arith.constant 0 : i32
    return %c0_i32, %c0_i32_0, %c0_i32_1 : i32, i32, i32
  }
  func.func @transform_3(%arg0: i32) -> (i32, i32, i32) {
    %c0_i32 = arith.constant 0 : i32
    %c0_i32_0 = arith.constant 0 : i32
    %c0_i32_1 = arith.constant 0 : i32
    %c0_i32_2 = arith.constant 0 : i32
    return %c0_i32, %c0_i32_0, %c0_i32_1 : i32, i32, i32
  }
  func.func @transform_4(%arg0: i32) -> (i32, i32) {
    %c0_i32 = arith.constant 0 : i32
    %c0_i32_0 = arith.constant 0 : i32
    %c0_i32_1 = arith.constant 0 : i32
    return %c0_i32, %c0_i32_0 : i32, i32
  }
  func.func @transform_5(%arg0: i32) -> (i32, i32) {
    %c0_i32 = arith.constant 0 : i32
    %c0_i32_0 = arith.constant 0 : i32
    return %arg0, %c0_i32 : i32, i32
  }
}

</mosaic_0001>

<llo_original>
// kernel: decoder_forward.1
$region0: #{decoder_forward.1}
  #allocation0 [shape = 'u32[]', space=smem, size = 0x4, offset = 0x4, fixed_abs, tag = 'smem constant byte address 0x4 - core index']
  #allocation1 [shape = 'u32[72,128]{1,0:T(1,128)}', space=vmem, size = 0x9000, scoped, tag = 'internal scratch']
  %s0 = inlined_call_operand.vmem [shape: f32[4,8], index: 0, kind: input, shape index: {}]
  %s1 = inlined_call_operand.vmem [shape: bf16[1,8,128], index: 1, kind: input, shape index: {}]
  %s2 = inlined_call_operand.vmem [shape: f32[1,1,128], index: 2, kind: input, shape index: {}]
  %s3 = inlined_call_operand.vmem [shape: bf16[1,128,16], index: 3, kind: input, shape index: {}]
  %s4 = inlined_call_operand.vmem [shape: f32[1,16], index: 4, kind: input, shape index: {}]
  %s5 = inlined_call_operand.hbm [shape: f32[4,16], index: 5, kind: output, shape index: {}]
  %s6 = sld [smem:[#allocation0]]
  $region30: #{decoder_forward.1} parent=0
    _
  %s8 = ssub.s32 1, %s6
  %s9 = scalar_select 0, %s8, %s6
  $region1: #{decoder_forward.1} parent=0
    #allocation2 [shape = 'u8[2048]{0}', space=vmem, size = 0x800, scoped, tag = 'output window, operand 0, single buffered']
    #allocation3 [shape = 's32[1]{0}', space=sflag, size = 0x4, scoped, tag = 'scoped memory for decoder_forward.1']
    %10 = vsyncpa [#allocation3], 0
    // Predicated region
    $region2: #{decoder_forward.1} parent=1 // pred_check
      _
    $region3: #{decoder_forward.1} parent=1 // pred_check_branch
      %12 = sbr.rel (0) target = $region5
    $region4: #{decoder_forward.1} parent=1 // pred_region
      _
    $region5: #{decoder_forward.1} parent=1 // pred_fallthru
      _
    // Predicated region
    $region6: #{decoder_forward.1} parent=1 // pred_check
      _
    $region7: #{decoder_forward.1} parent=1 // pred_check_branch
      %14 = sbr.rel (0) target = $region9
    $region8: #{decoder_forward.1} parent=1 // pred_region
      _
    $region9: #{decoder_forward.1} parent=1 // pred_fallthru
      _
    // Predicated region
    $region10: #{decoder_forward.1} parent=1 // pred_check
      _
    $region11: #{decoder_forward.1} parent=1 // pred_check_branch
      %16 = sbr.rel (0) target = $region13
    $region12: #{decoder_forward.1} parent=1 // pred_region
      _
    $region13: #{decoder_forward.1} parent=1 // pred_fallthru
      _
    // Predicated region
    $region14: #{decoder_forward.1} parent=1 // pred_check
      _
    $region15: #{decoder_forward.1} parent=1 // pred_check_branch
      %18 = sbr.rel (0) target = $region17
    $region16: #{decoder_forward.1} parent=1 // pred_region
      _
    $region17: #{decoder_forward.1} parent=1 // pred_fallthru
      _
    // Predicated region
    $region18: #{decoder_forward.1} parent=1 // pred_check
      _
    $region19: #{decoder_forward.1} parent=1 // pred_check_branch
      %20 = sbr.rel (0) target = $region21
    $region20: #{decoder_forward.1} parent=1 // pred_region
      _
    $region21: #{decoder_forward.1} parent=1 // pred_fallthru
      _
    %v22 = vld [vmem:[%s0] sm:$0xf]
    %v23 = vpack.c.bf16 %v22, %v22
    %v24 = vld [vmem:[%s1] sm:$0xf]
    %v25 = vld [vmem:[%s2] sm:$0x1]
    %v27 = vperm.slane %v25, 0
    %vm29 = vcmask 64512
    %v31 = vsel %vm29, %v23, 0
    %vm33 = vcmask 1043456
    %v35 = vsel %vm33, %v24, 0
    %37 = vmatpush.bf16.msra.mxu0 0
    %38 = vmatpush.bf16.msra.mxu0 0
    %39 = vmatpush.bf16.msra.mxu0 0
    %40 = vmatpush.bf16.msra.mxu0 0
    %41 = vmatpush.bf16.msra.mxu0 0
    %42 = vmatpush.bf16.msra.mxu0 0
    %43 = vmatpush.bf16.msra.mxu0 0
    %44 = vmatpush.bf16.msra.mxu0 %v35
    %45 = vmatmul.bf16.gmra.mxu0 %v31
    %v46 = vpop.f32.mrf.mxu0
    %v47 = vadd.f32 %v27, %v46
    %v48 = vpop.f32.mrf.mxu0
    %49 = vdwg.mxu0
    %v50 = vmax.f32 %v47, 0.0
    %v51 = vpack.c.bf16 %v50, %v50
    %v52 = vld [vmem:[%s3] sm:$0xf]
    %v53 = vld [vmem:[%s3 + $0x4] sm:$0xf]
    %v54 = vld [vmem:[%s3 + $0x8] sm:$0xf]
    %v55 = vld [vmem:[%s3 + $0xc] sm:$0xf]
    %v56 = vld [vmem:[%s3 + $0x10] sm:$0xf]
    %v57 = vld [vmem:[%s3 + $0x14] sm:$0xf]
    %v58 = vld [vmem:[%s3 + $0x18] sm:$0xf]
    %v59 = vld [vmem:[%s3 + $0x1c] sm:$0xf]
    %v60 = vld [vmem:[%s3 + $0x20] sm:$0xf]
    %v61 = vld [vmem:[%s3 + $0x24] sm:$0xf]
    %v62 = vld [vmem:[%s3 + $0x28] sm:$0xf]
    %v63 = vld [vmem:[%s3 + $0x2c] sm:$0xf]
    %v64 = vld [vmem:[%s3 + $0x30] sm:$0xf]
    %v65 = vld [vmem:[%s3 + $0x34] sm:$0xf]
    %v66 = vld [vmem:[%s3 + $0x38] sm:$0xf]
    %v67 = vld [vmem:[%s3 + $0x3c] sm:$0xf]
    %v68 = vld [vmem:[%s4] sm:$0x1]
    %v70 = vperm.slane %v68, 0
    %v88 = vunpack.c.l.b16 %v52
    %v89 = vunpack.c.l.b16 %v53
    %v90 = vunpack.c.l.b16 %v54
    %v91 = vunpack.c.l.b16 %v55
    %v92 = vunpack.c.l.b16 %v56
    %v93 = vunpack.c.l.b16 %v57
    %v94 = vunpack.c.l.b16 %v58
    %v95 = vunpack.c.l.b16 %v59
    %v96 = vunpack.c.l.b16 %v60
    %v97 = vunpack.c.l.b16 %v61
    %v98 = vunpack.c.l.b16 %v62
    %v99 = vunpack.c.l.b16 %v63
    %v100 = vunpack.c.l.b16 %v64
    %v101 = vunpack.c.l.b16 %v65
    %v102 = vunpack.c.l.b16 %v66
    %v103 = vunpack.c.l.b16 %v67
    %v104 = vpack.c.b16 %v89, %v88
    %v105 = vpack.c.b16 %v91, %v90
    %v106 = vpack.c.b16 %v93, %v92
    %v107 = vpack.c.b16 %v95, %v94
    %v108 = vpack.c.b16 %v97, %v96
    %v109 = vpack.c.b16 %v99, %v98
    %v110 = vpack.c.b16 %v101, %v100
    %v111 = vpack.c.b16 %v103, %v102
    %120 = vmatpush.bf16.msra.mxu0 %v111
    %121 = vmatpush.bf16.msra.mxu0 %v110
    %122 = vmatpush.bf16.msra.mxu0 %v109
    %123 = vmatpush.bf16.msra.mxu0 %v108
    %124 = vmatpush.bf16.msra.mxu0 %v107
    %125 = vmatpush.bf16.msra.mxu0 %v106
    %126 = vmatpush.bf16.msra.mxu0 %v105
    %127 = vmatpush.bf16.msra.mxu0 %v104
    %128 = vmatmul.bf16.gmra.mxu0 %v51
    %v129 = vpop.f32.mrf.mxu0
    %v130 = vadd.f32 %v70, %v129
    %v131 = vpop.f32.mrf.mxu0
    %132 = vdwg.mxu0
    %vm133 = vcmask 125952
    %134 = vst.msk [vmem:[#allocation2] sm:$0xf] %vm133, %v130
    // Predicated region
    $region22: #{decoder_forward.1} parent=1 // pred_check
      _
    $region23: #{decoder_forward.1} parent=1 // pred_check_branch
      %136 = sbr.rel (0) target = $region25
    $region24: #{decoder_forward.1} parent=1 // pred_region
      %138 = vsyncadd [#allocation3], 0
      %s140 = sshll.u32 [#allocation2], 4
      %s141 = int_to_ptr.vmem [resolvable:$true] %s140
      %s142 = sshll.u32 %s5, 4
      %s143 = int_to_ptr.hbm [resolvable:$true] %s142
      %145 = dma.vmem_to_hbm [thread:$0]  %s141, 64, %s143, [#allocation3]
    $region25: #{decoder_forward.1} parent=1 // pred_fallthru
      _
    // Predicated region
    $region26: #{decoder_forward.1} parent=1 // pred_check
      _
    $region27: #{decoder_forward.1} parent=1 // pred_check_branch
      %147 = sbr.rel (0) target = $region29
    $region28: #{decoder_forward.1} parent=1 // pred_region
      %149 = dma.done [#allocation3], 64
    $region29: #{decoder_forward.1} parent=1 // pred_fallthru
      _
    %150 = vsyncpa [#allocation3], 1

</llo_original>
